<compile_context>
chip_gen: v7x
topology: tpu7x:2x2x1
jax: 0.10.0
libtpu: 0.0.40
codegen_flags: <defaults>
</compile_context>

<pallas_src>
import functools

import jax
import jax.numpy as jnp
from jax.experimental import pallas as pl
from jax.experimental.pallas import tpu as pltpu

EMB_DIM = 30
HIN = EMB_DIM + 2        # embedding + (source_temp, target_temp)
HID = 32
NUM_LAYERS = 3
NUM_ATOM_TYPES = 5
PROW = 8                 # sublane-aligned row block inside the conditioner table
LANE = 128
MAX_TILE = 512           # lanes (atoms) per grid step at production sizes


def _round_up(x, m):
    return ((x + m - 1) // m) * m


def _flow_kernel(coords_ref, onehot_ref, table_ref, coords_out_ref, ssum_out_ref,
                 *, num_layers):
    """One lane-tile of atoms.

    Gather the per-atom affine coefficients with one tiny sublane-aligned (K=8)
    MXU matmul, then run the unrolled layer chain entirely in f32 vregs.
    Forward and reverse use the identical VPU form x <- x*ES + T because the
    coefficients were pre-composed per direction in the wrapper.
    """
    # (rows, 8) @ (8, tile) -> (rows, tile). Masked atoms hit the "null type"
    # column (ES=1, T=0, s=0); padded lanes hit an all-zero one-hot column.
    p = jnp.dot(table_ref[...], onehot_ref[...],
                preferred_element_type=jnp.float32)
    x = coords_ref[...].astype(jnp.float32)                  # (3, tile), lanes = atoms
    for l in range(num_layers):                              # static unroll, L is small
        base = l * 2 * PROW                                  # sublane-aligned slices
        x = x * p[base:base + 3, :] + p[base + PROW:base + PROW + 3, :]
    coords_out_ref[...] = x.astype(coords_out_ref.dtype)
    srow = num_layers * 2 * PROW
    ssum_out_ref[...] = p[srow:srow + 1, :]                  # masked per-atom sum_{l,d} s


@functools.partial(jax.jit,
                   static_argnames=("reverse", "source_temp", "target_temp"))
def pt_sequential_flow(coordinates, atom_types, adj_list, edge_batch_idx,
                       masked_elements, params, log_det=None, reverse=False,
                       source_temp=1.0, target_temp=2.0):
    """JAX wrapper mirroring PTSequentialFlow.forward."""
    del adj_list, edge_batch_idx  # TODO(synk): graph conditioning not implemented
    B, N, _ = coordinates.shape
    L, hin, hid = params["w1"].shape
    T = params["emb"].shape[0]
    BN = B * N

    # ---- Per-atom-type conditioner table (x-independent => computed once) ----
    feat_t = jnp.concatenate(
        [params["emb"].astype(jnp.float32),
         jnp.broadcast_to(jnp.array([source_temp, target_temp], jnp.float32), (T, 2))],
        axis=-1)                                                      # (T, HIN)
    hid_t = jnp.tanh(jnp.einsum("th,lhk->ltk", feat_t, params["w1"])
                     + params["b1"])                                  # (L, T, HID)
    p_t = jnp.einsum("ltk,lko->lto", hid_t, params["w2"]) + params["b2"]  # (L, T, 6)
    s_t = jnp.tanh(p_t[..., :3])                                      # (L, T, 3) log-scale
    t_t = p_t[..., 3:6]                                               # (L, T, 3) shift

    if reverse:
        es = jnp.exp(-s_t)                # x <- (x - t) * exp(-s) == x*ES + T
        tt = -t_t * es
        order = list(range(L))[::-1]
    else:
        es = jnp.exp(s_t)                 # x <- x * exp(s) + t     == x*ES + T
        tt = t_t
        order = list(range(L))
    s_total = jnp.sum(s_t, axis=(0, 2))                               # (T,)

    ncol = _round_up(T + 1, 8)            # real types + null column, sublane-padded
    rows = L * 2 * PROW + PROW
    table = jnp.zeros((rows, ncol), jnp.float32)
    for idx, l in enumerate(order):       # application order baked in (static)
        base = idx * 2 * PROW
        table = table.at[base:base + 3, :T].set(es[l].T)
        table = table.at[base:base + 3, T].set(1.0)                   # null type: ES = 1
        table = table.at[base + PROW:base + PROW + 3, :T].set(tt[l].T)  # null type: T = 0
    table = table.at[L * 2 * PROW, :T].set(s_total)                   # null type: s = 0

    # ---- Lane-dense layout: atoms in the lane dimension, padded to 128 ----
    if BN <= 1024:
        bn_pad = _round_up(BN, LANE)
        tile = bn_pad
    else:
        tile = MAX_TILE
        bn_pad = _round_up(BN, tile)
    n_tiles = bn_pad // tile

    coordsT = coordinates.reshape(BN, 3).T                            # (3, BN)
    coordsT = jnp.pad(coordsT, ((0, 0), (0, bn_pad - BN)))            # (3, BN_pad)

    eff_type = jnp.where(masked_elements.reshape(BN), T,
                         atom_types.reshape(BN))                      # masked -> null col
    onehot = jax.nn.one_hot(eff_type, ncol, dtype=jnp.float32).T      # (ncol, BN)
    onehot = jnp.pad(onehot, ((0, 0), (0, bn_pad - BN)))              # pad lanes: all-zero

    kernel = functools.partial(_flow_kernel, num_layers=L)
    flops = int(2 * rows * ncol * bn_pad + 6 * L * bn_pad)
    bytes_accessed = int(4 * (3 * bn_pad * 2 + ncol * bn_pad + bn_pad + rows * ncol))

    out_coordsT, ssumT = pl.pallas_call(
        kernel,
        grid=(n_tiles,),
        in_specs=[pl.BlockSpec((3, tile), lambda i: (0, i)),
                  pl.BlockSpec((ncol, tile), lambda i: (0, i)),
                  pl.BlockSpec((rows, ncol), lambda i: (0, 0))],
        out_specs=[pl.BlockSpec((3, tile), lambda i: (0, i)),
                   pl.BlockSpec((1, tile), lambda i: (0, i))],
        out_shape=[jax.ShapeDtypeStruct((3, bn_pad), coordinates.dtype),
                   jax.ShapeDtypeStruct((1, bn_pad), jnp.float32)],
        input_output_aliases={0: 0},      # coords fully overwritten in place
        compiler_params=pltpu.CompilerParams(
            dimension_semantics=("parallel",),
            vmem_limit_bytes=32 * 1024 * 1024),
        cost_estimate=pl.CostEstimate(flops=flops, transcendentals=0,
                                      bytes_accessed=bytes_accessed),
    )(coordsT, onehot, table)

    out_coords = out_coordsT[:, :BN].T.reshape(B, N, 3)

    # Per-batch log-determinant: wrapper-side segment sum (no (BN,B) one-hot).
    if log_det is None:
        log_det = jnp.zeros((B,), jnp.float32)
    delta = jnp.sum(ssumT[0, :BN].reshape(B, N), axis=-1)
    log_det_out = log_det - delta if reverse else log_det + delta
    return out_coords, log_det_out


def _reference_flow(coordinates, atom_types, masked_elements, params,
                    log_det=None, reverse=False, source_temp=1.0, target_temp=2.0):
    """Pure-JAX reference (per-layer MLP conditioner) for correctness checking."""
    B, N, _ = coordinates.shape
    L = params["w1"].shape[0]
    emb = params["emb"][atom_types]
    temps = jnp.broadcast_to(
        jnp.array([source_temp, target_temp], jnp.float32), (B, N, 2))
    feat = jnp.concatenate([emb, temps], axis=-1)
    valid = 1.0 - masked_elements.astype(jnp.float32)
    if log_det is None:
        log_det = jnp.zeros((B,), jnp.float32)
    x = coordinates
    order = list(range(L))
    if reverse:
        order = order[::-1]
    for i in order:
        hid = jnp.tanh(feat @ params["w1"][i] + params["b1"][i])
        p = hid @ params["w2"][i] + params["b2"][i]
        s = jnp.tanh(p[..., :3]) * valid[..., None]
        t = p[..., 3:] * valid[..., None]
        if reverse:
            x = (x - t) * jnp.exp(-s)
            log_det = log_det - jnp.sum(s, axis=(1, 2))
        else:
            x = x * jnp.exp(s) + t
            log_det = log_det + jnp.sum(s, axis=(1, 2))
    return x, log_det


if __name__ == "__main__":
    key = jax.random.PRNGKey(0)
    ks = jax.random.split(key, 8)

    B, N = 2, 8
    coordinates = jax.random.normal(ks[0], (B, N, 3), jnp.float32)
    atom_types = jax.random.randint(ks[1], (B, N), 0, NUM_ATOM_TYPES)
    masked_elements = jnp.zeros((B, N), jnp.bool_).at[:, N - 2:].set(True)
    adj_list = jnp.array([[0, 1], [1, 2], [2, 3], [0, 1]], jnp.int32)      # [E, 2]
    edge_batch_idx = jnp.array([0, 0, 0, 1], jnp.int32)                    # [E]

    # Deterministic synthetic parameters (shapes implied by the module design).
    params = {
        "emb": 0.1 * jax.random.normal(ks[2], (NUM_ATOM_TYPES, EMB_DIM), jnp.float32),
        "w1": 0.2 * jax.random.normal(ks[3], (NUM_LAYERS, HIN, HID), jnp.float32),
        "b1": 0.1 * jax.random.normal(ks[4], (NUM_LAYERS, 1, HID), jnp.float32),
        "w2": 0.2 * jax.random.normal(ks[5], (NUM_LAYERS, HID, 6), jnp.float32),
        "b2": 0.1 * jax.random.normal(ks[6], (NUM_LAYERS, 1, 6), jnp.float32),
    }

    # Forward pass through the Pallas kernel.
    out_coords, log_det = pt_sequential_flow(
        coordinates, atom_types, adj_list, edge_batch_idx, masked_elements,
        params, reverse=False, source_temp=1.0, target_temp=2.0)
    jax.block_until_ready((out_coords, log_det))

    # Check against pure-JAX reference.
    ref_coords, ref_ld = _reference_flow(
        coordinates, atom_types, masked_elements, params,
        reverse=False, source_temp=1.0, target_temp=2.0)
    assert jnp.allclose(out_coords, ref_coords, rtol=1e-3, atol=1e-3)
    assert jnp.allclose(log_det, ref_ld, rtol=1e-3, atol=1e-3)

    # Check invertibility: reverse(forward(x)) == x, log_det cancels.
    back_coords, back_ld = pt_sequential_flow(
        out_coords, atom_types, adj_list, edge_batch_idx, masked_elements,
        params, log_det=log_det, reverse=True, source_temp=1.0, target_temp=2.0)
    jax.block_until_ready((back_coords, back_ld))
    assert jnp.allclose(back_coords, coordinates, rtol=1e-3, atol=1e-3)
    assert jnp.allclose(back_ld, jnp.zeros((B,), jnp.float32), atol=1e-3)

    print("KERNEL_OK")
</pallas_src>

<mosaic_0001>
module attributes {stable_mosaic.version = 11 : i64} {
  func.func @_flow_kernel(%arg0: i32, %arg1: memref<3x128xf32, #tpu.memory_space<vmem>>, %arg2: memref<8x128xf32, #tpu.memory_space<vmem>>, %arg3: memref<56x8xf32, #tpu.memory_space<vmem>>, %arg4: memref<3x128xf32, #tpu.memory_space<vmem>>, %arg5: memref<1x128xf32, #tpu.memory_space<vmem>>) attributes {dimension_semantics = [#tpu.dimension_semantics<parallel>], iteration_bounds = array<i64: 1>, scalar_prefetch = 0 : i64, scratch_operands = 0 : i64, tpu.core_type = #tpu.core_type<tc>, window_params = [{transform_indices = @transform_0, window_bounds = array<i64: 3, 128>}, {transform_indices = @transform_1, window_bounds = array<i64: 8, 128>}, {pipeline_mode = #tpu.pipeline_mode<synchronous>, transform_indices = @transform_2, window_bounds = array<i64: 56, 8>}, {transform_indices = @transform_3, window_bounds = array<i64: 3, 128>}, {transform_indices = @transform_4, window_bounds = array<i64: 1, 128>}]} {
    %c0 = arith.constant 0 : index
    %c0_0 = arith.constant 0 : index
    %0 = vector.load %arg3[%c0, %c0_0] : memref<56x8xf32, #tpu.memory_space<vmem>>, vector<56x8xf32>
    %c0_1 = arith.constant 0 : index
    %c0_2 = arith.constant 0 : index
    %1 = vector.load %arg2[%c0_1, %c0_2] : memref<8x128xf32, #tpu.memory_space<vmem>>, vector<8x128xf32>
    %cst = arith.constant dense<0.000000e+00> : vector<56x128xf32>
    %2 = tpu.matmul %0, %1, %cst {dimension_numbers = #tpu.dot_dimension_numbers<[1], [0], [0], [1], [0, 0, 1, 1], [], []>} : vector<56x8xf32>, vector<8x128xf32>, vector<56x128xf32> -> vector<56x128xf32>
    %c0_3 = arith.constant 0 : index
    %c0_4 = arith.constant 0 : index
    %3 = vector.load %arg1[%c0_3, %c0_4] : memref<3x128xf32, #tpu.memory_space<vmem>>, vector<3x128xf32>
    %4 = vector.extract_strided_slice %2 {offsets = [0, 0], sizes = [3, 128], strides = [1, 1]} : vector<56x128xf32> to vector<3x128xf32>
    %5 = arith.mulf %3, %4 : vector<3x128xf32>
    %6 = vector.extract_strided_slice %2 {offsets = [8, 0], sizes = [3, 128], strides = [1, 1]} : vector<56x128xf32> to vector<3x128xf32>
    %7 = arith.addf %5, %6 : vector<3x128xf32>
    %8 = vector.extract_strided_slice %2 {offsets = [16, 0], sizes = [3, 128], strides = [1, 1]} : vector<56x128xf32> to vector<3x128xf32>
    %9 = arith.mulf %7, %8 : vector<3x128xf32>
    %10 = vector.extract_strided_slice %2 {offsets = [24, 0], sizes = [3, 128], strides = [1, 1]} : vector<56x128xf32> to vector<3x128xf32>
    %11 = arith.addf %9, %10 : vector<3x128xf32>
    %12 = vector.extract_strided_slice %2 {offsets = [32, 0], sizes = [3, 128], strides = [1, 1]} : vector<56x128xf32> to vector<3x128xf32>
    %13 = arith.mulf %11, %12 : vector<3x128xf32>
    %14 = vector.extract_strided_slice %2 {offsets = [40, 0], sizes = [3, 128], strides = [1, 1]} : vector<56x128xf32> to vector<3x128xf32>
    %15 = arith.addf %13, %14 : vector<3x128xf32>
    %c0_5 = arith.constant 0 : index
    %c0_6 = arith.constant 0 : index
    %16 = vector.load %arg4[%c0_5, %c0_6] : memref<3x128xf32, #tpu.memory_space<vmem>>, vector<3x128xf32>
    tpu.vector_store %arg4[%c0_5, %c0_6], %15 {strides = array<i32>} : memref<3x128xf32, #tpu.memory_space<vmem>>, vector<3x128xf32>,
    %17 = vector.extract_strided_slice %2 {offsets = [48, 0], sizes = [1, 128], strides = [1, 1]} : vector<56x128xf32> to vector<1x128xf32>
    %c0_7 = arith.constant 0 : index
    %c0_8 = arith.constant 0 : index
    %18 = vector.load %arg5[%c0_7, %c0_8] : memref<1x128xf32, #tpu.memory_space<vmem>>, vector<1x128xf32>
    tpu.vector_store %arg5[%c0_7, %c0_8], %17 {strides = array<i32>} : memref<1x128xf32, #tpu.memory_space<vmem>>, vector<1x128xf32>,
    return
  }
  func.func @transform_0(%arg0: i32) -> (i32, i32) {
    %c0_i32 = arith.constant 0 : i32
    %c0_i32_0 = arith.constant 0 : i32
    return %c0_i32, %arg0 : i32, i32
  }
  func.func @transform_1(%arg0: i32) -> (i32, i32) {
    %c0_i32 = arith.constant 0 : i32
    %c0_i32_0 = arith.constant 0 : i32
    return %c0_i32, %arg0 : i32, i32
  }
  func.func @transform_2(%arg0: i32) -> (i32, i32) {
    %c0_i32 = arith.constant 0 : i32
    %c0_i32_0 = arith.constant 0 : i32
    %c0_i32_1 = arith.constant 0 : i32
    return %c0_i32, %c0_i32_0 : i32, i32
  }
  func.func @transform_3(%arg0: i32) -> (i32, i32) {
    %c0_i32 = arith.constant 0 : i32
    %c0_i32_0 = arith.constant 0 : i32
    return %c0_i32, %arg0 : i32, i32
  }
  func.func @transform_4(%arg0: i32) -> (i32, i32) {
    %c0_i32 = arith.constant 0 : i32
    %c0_i32_0 = arith.constant 0 : i32
    return %c0_i32, %arg0 : i32, i32
  }
}

</mosaic_0001>

<llo_original>
// kernel: squeeze.13
$region0: #{squeeze.13}
  %s0 = inlined_call_operand.vmem [shape: f32[16], index: 0, kind: input, shape index: {}]
  %s1 = inlined_call_operand.vmem [shape: f32[2,8], index: 1, kind: output, shape index: {}]
  $region1: #{squeeze.13} parent=0
    #allocation0 [shape = 'u8[4096]{0}', space=vmem, size = 0x1000, scoped, tag = 'scoped mem for output reshape']
    #allocation1 [shape = 'u8[4096]{0}', space=vmem, size = 0x1000, scoped, tag = 'scoped mem for input reshape']
    %s3 = sshllo.u32 0, 1
    %v4 = vld [vmem:[%s0] sm:%s3]
    %5 = vst [vmem:[#allocation1] sm:%s3] %v4
    %v6 = vld [vmem:[#allocation1] sm:$0x1]
    %vm7 = vcmask 64512
    %8 = vst.msk [vmem:[#allocation0] sm:$0x1] %vm7, %v6
    %v9 = vld [vmem:[#allocation1] sm:$0x1]
    %10 = vrot.lane.b32.xlu0 %v9, 120
    %v11 = vpop.permute.xlu0 %10
    %vm12 = vcmask 64512
    %s13 = scalar_lea.vmem [#allocation0], 1
    %14 = vst.msk [vmem:[%s13] sm:$0x1] %vm12, %v11
    %s16 = sshllo.u32 0, 2
    %v18 = vld [vmem:[#allocation0] sm:%s16]
    %s19 = sshllo.u32 0, 2
    %20 = vst [vmem:[%s1] sm:%s19] %v18

// kernel: pt_sequential_flow.1
$region0: #{pt_sequential_flow.1}
  #allocation0 [shape = 'u32[]', space=smem, size = 0x4, offset = 0x4, fixed_abs, tag = 'smem constant byte address 0x4 - core index']
  #allocation1 [shape = 'u32[144,128]{1,0:T(1,128)}', space=vmem, size = 0x12000, scoped, tag = 'internal scratch']
  %s0 = inlined_call_operand.vmem [shape: f32[3,128], index: 0, kind: input, shape index: {}, may-alias: {0,3}]
  %s1 = inlined_call_operand.vmem [shape: f32[8,128], index: 1, kind: input, shape index: {}]
  %s2 = inlined_call_operand.vmem [shape: f32[56,8], index: 2, kind: input, shape index: {}]
  %s3 = inlined_call_operand.vmem [shape: f32[3,128], index: 3, kind: output, shape index: {0}, may-alias: {0,3}]
  %s4 = inlined_call_operand.vmem [shape: f32[1,128], index: 4, kind: output, shape index: {1}]
  %5 = xla_tuple %s3, %s4
  %s6 = sld [smem:[#allocation0]]
  $region30: #{pt_sequential_flow.1} parent=0
    _
  %s8 = ssub.s32 1, %s6
  %s9 = scalar_select 0, %s8, %s6
  // Predicated region
  $region2: #{pt_sequential_flow.1} parent=0 // pred_check
    _
  $region3: #{pt_sequential_flow.1} parent=0 // pred_check_branch
    %11 = sbr.rel (0) target = $region5
  $region4: #{pt_sequential_flow.1} parent=0 // pred_region
    _
  $region5: #{pt_sequential_flow.1} parent=0 // pred_fallthru
    _
  // Predicated region
  $region6: #{pt_sequential_flow.1} parent=0 // pred_check
    _
  $region7: #{pt_sequential_flow.1} parent=0 // pred_check_branch
    %13 = sbr.rel (0) target = $region9
  $region8: #{pt_sequential_flow.1} parent=0 // pred_region
    _
  $region9: #{pt_sequential_flow.1} parent=0 // pred_fallthru
    _
  // Predicated region
  $region10: #{pt_sequential_flow.1} parent=0 // pred_check
    _
  $region11: #{pt_sequential_flow.1} parent=0 // pred_check_branch
    %15 = sbr.rel (0) target = $region13
  $region12: #{pt_sequential_flow.1} parent=0 // pred_region
    _
  $region13: #{pt_sequential_flow.1} parent=0 // pred_fallthru
    _
  %v16 = vld [vmem:[%s2] sm:$0xff]
  %v17 = vld [vmem:[%s2 + $0x8] sm:$0xff]
  %v18 = vld [vmem:[%s2 + $0x10] sm:$0xff]
  %v19 = vld [vmem:[%s2 + $0x18] sm:$0xff]
  %v20 = vld [vmem:[%s2 + $0x20] sm:$0xff]
  %v21 = vld [vmem:[%s2 + $0x28] sm:$0xff]
  %v22 = vld [vmem:[%s2 + $0x30] sm:$0xff]
  %v23 = vld [vmem:[%s1] sm:$0xff]
  %vm24 = vcmask 64512
  %v26 = vsel %vm24, %v16, 0
  %v29 = vsel %vm24, %v17, 0
  %v32 = vsel %vm24, %v18, 0
  %v35 = vsel %vm24, %v19, 0
  %v38 = vsel %vm24, %v20, 0
  %v41 = vsel %vm24, %v21, 0
  %v44 = vsel %vm24, %v22, 0
  %46 = vmatprep.subr.mxu0 0.0
  %47 = vmatpush1.msra.mxu0 %v23
  %48 = vmatprep.subr.mxu0 0.0
  %49 = vmatpush1.msra.mxu0 0.0
  %50 = vmatprep.subr.mxu0 0.0
  %51 = vmatpush1.msra.mxu0 0.0
  %52 = vmatprep.subr.mxu0 0.0
  %53 = vmatpush1.msra.mxu0 0.0
  %54 = vmatprep.subr.mxu0 0.0
  %55 = vmatpush1.msra.mxu0 0.0
  %56 = vmatprep.subr.mxu0 0.0
  %57 = vmatpush1.msra.mxu0 0.0
  %58 = vmatprep.subr.mxu0 0.0
  %59 = vmatpush1.msra.mxu0 0.0
  %60 = vmatprep.subr.mxu0 0.0
  %61 = vmatpush1.msra.mxu0 0.0
  %62 = vmatprep.subr.mxu0 0.0
  %63 = vmatpush1.msra.mxu0 0.0
  %64 = vmatprep.subr.mxu0 0.0
  %65 = vmatpush1.msra.mxu0 0.0
  %66 = vmatprep.subr.mxu0 0.0
  %67 = vmatpush1.msra.mxu0 0.0
  %68 = vmatprep.subr.mxu0 0.0
  %69 = vmatpush1.msra.mxu0 0.0
  %70 = vmatprep.subr.mxu0 0.0
  %71 = vmatpush1.msra.mxu0 0.0
  %72 = vmatprep.subr.mxu0 0.0
  %73 = vmatpush1.msra.mxu0 0.0
  %74 = vmatprep.subr.mxu0 0.0
  %75 = vmatpush1.msra.mxu0 0.0
  %76 = vmatprep.subr.mxu0 0.0
  %77 = vmatpush1.msra.mxu0 0.0
  %78 = vmatprep.subr.mxu0 0.0
  %79 = vmatpush1.msra.mxu0 0.0
  %80 = vmatprep.subr.mxu0 0.0
  %81 = vmatpush1.msra.mxu0 0.0
  %82 = vmatprep.subr.mxu0 0.0
  %83 = vmatpush1.msra.mxu0 0.0
  %84 = vmatprep.subr.mxu0 0.0
  %85 = vmatpush1.msra.mxu0 0.0
  %86 = vmatprep.subr.mxu0 0.0
  %87 = vmatpush1.msra.mxu0 0.0
  %88 = vmatprep.subr.mxu0 0.0
  %89 = vmatpush1.msra.mxu0 0.0
  %90 = vmatprep.subr.mxu0 0.0
  %91 = vmatpush1.msra.mxu0 0.0
  %92 = vmatprep.subr.mxu0 0.0
  %93 = vmatpush1.msra.mxu0 0.0
  %94 = vmatprep.subr.mxu0 0.0
  %95 = vmatpush1.msra.mxu0 0.0
  %96 = vmatprep.subr.mxu0 0.0
  %97 = vmatpush1.msra.mxu0 0.0
  %98 = vmatprep.subr.mxu0 0.0
  %99 = vmatpush1.msra.mxu0 0.0
  %100 = vmatprep.subr.mxu0 0.0
  %101 = vmatpush1.msra.mxu0 0.0
  %102 = vmatprep.subr.mxu0 0.0
  %103 = vmatpush1.msra.mxu0 0.0
  %104 = vmatprep.subr.mxu0 0.0
  %105 = vmatpush1.msra.mxu0 0.0
  %106 = vmatprep.subr.mxu0 0.0
  %107 = vmatpush1.msra.mxu0 0.0
  %108 = vmatprep.subr.mxu0 0.0
  %109 = vmatpush1.msra.mxu0 0.0
  %110 = vmatprep.mubr.f32.mxu0 0.0
  %111 = vmatmul.mubr.f32.gmra.mrb[0].mxu0 %v26
  %v112 = vpop.f32.mrb[0].mxu0
  %v113 = vadd.f32 0.0, %v112
  %v114 = vpop.f32.mrb[0].mxu0
  %115 = vmatprep.mubr.f32.mxu0 0.0
  %116 = vmatmul.mubr.f32.gmra.mrb[0].mxu0 %v29
  %v117 = vpop.f32.mrb[0].mxu0
  %v118 = vadd.f32 0.0, %v117
  %v119 = vpop.f32.mrb[0].mxu0
  %120 = vmatprep.mubr.f32.mxu0 0.0
  %121 = vmatmul.mubr.f32.gmra.mrb[0].mxu0 %v32
  %v122 = vpop.f32.mrb[0].mxu0
  %v123 = vadd.f32 0.0, %v122
  %v124 = vpop.f32.mrb[0].mxu0
  %125 = vmatprep.mubr.f32.mxu0 0.0
  %126 = vmatmul.mubr.f32.gmra.mrb[0].mxu0 %v35
  %v127 = vpop.f32.mrb[0].mxu0
  %v128 = vadd.f32 0.0, %v127
  %v129 = vpop.f32.mrb[0].mxu0
  %130 = vmatprep.mubr.f32.mxu0 0.0
  %131 = vmatmul.mubr.f32.gmra.mrb[0].mxu0 %v38
  %v132 = vpop.f32.mrb[0].mxu0
  %v133 = vadd.f32 0.0, %v132
  %v134 = vpop.f32.mrb[0].mxu0
  %135 = vmatprep.mubr.f32.mxu0 0.0
  %136 = vmatmul.mubr.f32.gmra.mrb[0].mxu0 %v41
  %v137 = vpop.f32.mrb[0].mxu0
  %v138 = vadd.f32 0.0, %v137
  %v139 = vpop.f32.mrb[0].mxu0
  %140 = vmatprep.mubr.f32.mxu0 0.0
  %141 = vmatmul.mubr.f32.gmra.mrb[0].mxu0 %v44
  %v142 = vpop.f32.mrb[0].mxu0
  %v143 = vadd.f32 0.0, %v142
  %v144 = vpop.f32.mrb[0].mxu0
  %145 = vdwg.mxu0
  %v146 = vld [vmem:[%s0] sm:$0x7]
  %v147 = vmul.f32 %v146, %v113
  %v148 = vadd.f32 %v147, %v118
  %v149 = vmul.f32 %v148, %v123
  %v150 = vadd.f32 %v149, %v128
  %v151 = vmul.f32 %v150, %v133
  %v152 = vadd.f32 %v151, %v138
  %153 = vst [vmem:[%s3] sm:$0x7] %v152
  %154 = vst [vmem:[%s4] sm:$0x1] %v143
  // Predicated region
  $region14: #{pt_sequential_flow.1} parent=0 // pred_check
    _
  $region15: #{pt_sequential_flow.1} parent=0 // pred_check_branch
    %156 = sbr.rel (0) target = $region17
  $region16: #{pt_sequential_flow.1} parent=0 // pred_region
    _
  $region17: #{pt_sequential_flow.1} parent=0 // pred_fallthru
    _
  // Predicated region
  $region18: #{pt_sequential_flow.1} parent=0 // pred_check
    _
  $region19: #{pt_sequential_flow.1} parent=0 // pred_check_branch
    %158 = sbr.rel (0) target = $region21
  $region20: #{pt_sequential_flow.1} parent=0 // pred_region
    _
  $region21: #{pt_sequential_flow.1} parent=0 // pred_fallthru
    _
  // Predicated region
  $region22: #{pt_sequential_flow.1} parent=0 // pred_check
    _
  $region23: #{pt_sequential_flow.1} parent=0 // pred_check_branch
    %160 = sbr.rel (0) target = $region25
  $region24: #{pt_sequential_flow.1} parent=0 // pred_region
    _
  $region25: #{pt_sequential_flow.1} parent=0 // pred_fallthru
    _
  // Predicated region
  $region26: #{pt_sequential_flow.1} parent=0 // pred_check
    _
  $region27: #{pt_sequential_flow.1} parent=0 // pred_check_branch
    %162 = sbr.rel (0) target = $region29
  $region28: #{pt_sequential_flow.1} parent=0 // pred_region
    _
  $region29: #{pt_sequential_flow.1} parent=0 // pred_fallthru
    _

</llo_original>
